<compile_context>
chip_gen: v7x
topology: tpu7x:2x2x1
jax: 0.10.0
libtpu: 0.0.40
codegen_flags: <defaults>
</compile_context>

<pallas_src>
import functools

import jax
import jax.numpy as jnp
from jax import lax
from jax.experimental import pallas as pl
from jax.experimental.pallas import tpu as pltpu


MULTIRES = 10
PE_DIM = 3 + 3 * 2 * MULTIRES      # 63
SIN_PAD = 32                       # 10 freqs * 3 dims = 30 sin (or cos) cols, padded to 32
OUT_PAD = 8                        # 3 output channels padded to 8 sublanes (transposed out)


# ----------------------------- NeRF positional embedder (reference / glue) ------------------

def get_embedder(multires, input_dims=3):
    """Standard NeRF embedder: identity + sin/cos at 2^0 .. 2^(multires-1)."""
    freq_bands = 2.0 ** jnp.arange(multires, dtype=jnp.float32)
    out_dim = input_dims + input_dims * 2 * multires

    def embed(x):
        outs = [x]
        for f in freq_bands:
            outs.append(jnp.sin(x * f))
            outs.append(jnp.cos(x * f))
        return jnp.concatenate(outs, axis=-1)

    return embed, out_dim


# ----------------------------- Pallas fused kernel -------------------------------------------

def _posterior_kernel(ix_ref, x_ref, f_ref,
                      w_ix_ref, w_sin_ref, w_cos_ref, b1_ref,
                      w2_ref, b2_ref, w3_ref, b3_ref,
                      wo_t_ref, bo_t_ref, o_ref):
    # --- NeRF positional embedding, computed in-kernel in f32 (EUP slot is free here) ---
    x = x_ref[...]                              # (tile_n, 3) f32
    f = f_ref[...]                              # (3, SIN_PAD) f32, f[j, c] = freq(c) if c%3==j
    t = (x[:, 0:1] * f[0:1, :]
         + x[:, 1:2] * f[1:2, :]
         + x[:, 2:3] * f[2:3, :])               # (tile_n, SIN_PAD) f32 : x[:, c%3] * 2^(c//3)
    s = jnp.sin(t).astype(jnp.bfloat16)
    c = jnp.cos(t).astype(jnp.bfloat16)

    # --- Layer 1 (split W1): h @ W1 == [inputs|x] @ W1_ix + sin @ W1_sin + cos @ W1_cos ---
    y = (jnp.dot(ix_ref[...], w_ix_ref[...], preferred_element_type=jnp.float32)
         + jnp.dot(s, w_sin_ref[...], preferred_element_type=jnp.float32)
         + jnp.dot(c, w_cos_ref[...], preferred_element_type=jnp.float32)
         + b1_ref[...])
    a = jnp.maximum(y, 0.0)

    # --- Hidden layers 2, 3 ---
    a = jnp.maximum(
        jnp.dot(a.astype(jnp.bfloat16), w2_ref[...],
                preferred_element_type=jnp.float32) + b2_ref[...], 0.0)
    a = jnp.maximum(
        jnp.dot(a.astype(jnp.bfloat16), w3_ref[...],
                preferred_element_type=jnp.float32) + b3_ref[...], 0.0)

    # --- Output layer, computed transposed so the store is lane-dense: (OUT_PAD, tile_n) ---
    out = lax.dot_general(wo_t_ref[...], a.astype(jnp.bfloat16),
                          (((1,), (1,)), ((), ())),
                          preferred_element_type=jnp.float32)
    o_ref[...] = out + bo_t_ref[...]            # (OUT_PAD, 1) bias lane-broadcast


def _round_up(v, m):
    return ((v + m - 1) // m) * m


def _pick_tile(n):
    """Pick (tile_n, n_pad). Small N -> one right-sized tile; big N -> 256..1024-row tiles,
    multiple of 256, keeping >= ~4 tiles so both v7x TensorCores get work."""
    n8 = _round_up(n, 8)
    if n8 <= 512:
        return n8, n8
    tile = max(256, min(1024, ((n8 // 4) // 256) * 256))
    return tile, _round_up(n, tile)


@jax.jit
def posterior_forward(params, x, rgb_all, mask_all):
    """x: (N,3) f32; rgb_all: (M,N,3) f32; mask_all: (M,N) bool -> (N,3) f32."""
    w1, b1, w2, b2, w3, b3, wo, bo = params
    M, N, _ = rgb_all.shape
    width = w1.shape[1]
    assert w1.shape[0] == M * 3 + PE_DIM, "W1 rows must match n_camera*3 + 63"

    # ---------- XLA glue (single cheap fused pass) ----------
    # rgb_all[~mask_all] = 0 ; permute(1,0,2).reshape(N, M*3) ; append identity x columns.
    rgb_masked = jnp.where(mask_all[..., None], rgb_all, 0.0)
    inputs = jnp.transpose(rgb_masked, (1, 0, 2)).reshape(N, M * 3)
    ix = jnp.concatenate([inputs, x.astype(jnp.float32)], axis=-1).astype(jnp.bfloat16)
    in_dim_ix = M * 3 + 3

    # ---------- split W1 rows to match the in-kernel embedding layout ----------
    base = M * 3 + 3
    sin_rows = (base + 6 * jnp.arange(MULTIRES)[:, None] + jnp.arange(3)[None, :]).reshape(-1)
    cos_rows = sin_rows + 3
    w_ix = w1[:base].astype(jnp.bfloat16)                                  # (M*3+3, width)
    w_sin = jnp.zeros((SIN_PAD, width), jnp.bfloat16).at[:30].set(
        w1[sin_rows].astype(jnp.bfloat16))
    w_cos = jnp.zeros((SIN_PAD, width), jnp.bfloat16).at[:30].set(
        w1[cos_rows].astype(jnp.bfloat16))
    w2b = w2.astype(jnp.bfloat16)
    w3b = w3.astype(jnp.bfloat16)
    wo_t = jnp.zeros((OUT_PAD, width), jnp.bfloat16).at[:3].set(
        wo.T.astype(jnp.bfloat16))                                          # (8, width)
    bo_t = jnp.zeros((OUT_PAD, 1), jnp.float32).at[:3, 0].set(bo.reshape(-1))

    # frequency rows: f_rows[j, c] = 2^(c//3) if c % 3 == j else 0   (cols >= 30 are 0)
    freqs = jnp.repeat(2.0 ** jnp.arange(MULTIRES, dtype=jnp.float32), 3)   # (30,)
    f_rows = jnp.zeros((3, SIN_PAD), jnp.float32).at[
        jnp.arange(30) % 3, jnp.arange(30)].set(freqs)

    # ---------- tiling ----------
    tile_n, n_pad = _pick_tile(N)
    grid = (n_pad // tile_n,)
    ix_p = jnp.pad(ix, ((0, n_pad - N), (0, 0)))
    x_p = jnp.pad(x.astype(jnp.float32), ((0, n_pad - N), (0, 0)))

    full = lambda i: (0, 0)

    flops = 2 * n_pad * width * (in_dim_ix + 2 * SIN_PAD + 2 * width + OUT_PAD)
    bytes_accessed = (
        n_pad * (in_dim_ix * 2 + 3 * 4)                                     # ix bf16 + x f32
        + OUT_PAD * n_pad * 4                                               # transposed output
        + (in_dim_ix + 2 * SIN_PAD + 2 * width + OUT_PAD) * width * 2       # bf16 weights
        + (3 * width + OUT_PAD) * 4 + 3 * SIN_PAD * 4)                      # biases + freqs

    out_t = pl.pallas_call(
        _posterior_kernel,
        out_shape=jax.ShapeDtypeStruct((OUT_PAD, n_pad), jnp.float32),
        grid_spec=pltpu.PrefetchScalarGridSpec(
            num_scalar_prefetch=0,
            grid=grid,
            in_specs=[
                pl.BlockSpec((tile_n, in_dim_ix), lambda i: (i, 0)),   # [inputs|x] tile (bf16)
                pl.BlockSpec((tile_n, 3), lambda i: (i, 0)),           # x tile (f32)
                pl.BlockSpec((3, SIN_PAD), full),                      # frequency rows
                pl.BlockSpec((in_dim_ix, width), full),                # W1_ix
                pl.BlockSpec((SIN_PAD, width), full),                  # W1_sin (padded rows)
                pl.BlockSpec((SIN_PAD, width), full),                  # W1_cos (padded rows)
                pl.BlockSpec((1, width), full),                        # b1
                pl.BlockSpec((width, width), full),                    # W2
                pl.BlockSpec((1, width), full),                        # b2
                pl.BlockSpec((width, width), full),                    # W3
                pl.BlockSpec((1, width), full),                        # b3
                pl.BlockSpec((OUT_PAD, width), full),                  # Wout^T (padded rows)
                pl.BlockSpec((OUT_PAD, 1), full),                      # bout^T
            ],
            out_specs=pl.BlockSpec((OUT_PAD, tile_n), lambda i: (0, i)),
        ),
        compiler_params=pltpu.CompilerParams(
            dimension_semantics=("parallel",)),
        cost_estimate=pl.CostEstimate(
            flops=flops, transcendentals=2 * n_pad * SIN_PAD,
            bytes_accessed=bytes_accessed),
    )(ix_p, x_p, f_rows, w_ix, w_sin, w_cos, b1, w2b, b2, w3b, b3, wo_t, bo_t)

    return out_t[:3, :N].T                                             # (N, 3)


# ----------------------------- Posterior module (JAX) ----------------------------------------

class PosteriorPallas:
    def __init__(self, key, n_camera=8, n_layers=3, width=128):
        assert n_layers == 3, "kernel is written for the default n_layers=3"
        self.pe_embed, embed_dim = get_embedder(10)
        self.view_embed, view_embed_dim = get_embedder(4)   # unused in forward (torch parity)
        self.n_camera = n_camera
        self.n_layers = n_layers
        self.width = width
        in_dim = n_camera * 3 + embed_dim

        def linear_init(key, fan_in, fan_out):
            kw, kb = jax.random.split(key)
            bound = 1.0 / jnp.sqrt(float(fan_in))
            w = jax.random.uniform(kw, (fan_in, fan_out), jnp.float32, -bound, bound)
            b = jax.random.uniform(kb, (1, fan_out), jnp.float32, -bound, bound)
            return w, b

        keys = jax.random.split(key, 8)
        self.w1, self.b1 = linear_init(keys[0], in_dim, width)
        self.w2, self.b2 = linear_init(keys[1], width, width)
        self.w3, self.b3 = linear_init(keys[2], width, width)
        self.wo, self.bo = linear_init(keys[3], width, 3)
        # spec_linear / spec_linear2 / spec_linear3 exist in __init__ but are unused in forward.
        self.spec_w1, self.spec_b1 = linear_init(keys[4], embed_dim + view_embed_dim, width)
        self.spec_w2, self.spec_b2 = linear_init(keys[5], width, width)
        self.spec_w3, self.spec_b3 = linear_init(keys[6], width, 1)

    def params(self):
        return (self.w1, self.b1, self.w2, self.b2, self.w3, self.b3, self.wo, self.bo)

    def forward(self, x, rgb_all, dirs_all, mask_all, view_dir, is_log=False):
        """
        x: (N,3); rgb_all: (M,N,3); dirs_all: (M,N,3) unused; mask_all: (M,N) bool;
        view_dir unused. Returns (N, 3).
        """
        del dirs_all, view_dir, is_log
        return posterior_forward(self.params(), x, rgb_all, mask_all)

    # pure-JAX f32 reference for correctness checking
    def forward_ref(self, x, rgb_all, dirs_all, mask_all, view_dir):
        del dirs_all, view_dir
        M, N, _ = rgb_all.shape
        rgb_masked = jnp.where(mask_all[..., None], rgb_all, 0.0)
        inputs = jnp.transpose(rgb_masked, (1, 0, 2)).reshape(N, M * 3)
        h = jnp.concatenate([inputs, self.pe_embed(x)], axis=-1).astype(jnp.float32)
        h = jnp.maximum(h @ self.w1 + self.b1, 0.0)
        h = jnp.maximum(h @ self.w2 + self.b2, 0.0)
        h = jnp.maximum(h @ self.w3 + self.b3, 0.0)
        return h @ self.wo + self.bo


# ----------------------------- main ----------------------------------------------------------

if __name__ == "__main__":
    key = jax.random.PRNGKey(0)
    k_model, k_x, k_rgb, k_dirs, k_mask, k_view = jax.random.split(key, 6)

    # Small shapes consistent with the module: M cameras, N query points.
    M = 8          # n_camera
    N = 16         # number of points
    WIDTH = 128    # module default hidden width

    model = PosteriorPallas(k_model, n_camera=M, n_layers=3, width=WIDTH)

    x = jax.random.normal(k_x, (N, 3), jnp.float32)
    rgb_all = jax.random.uniform(k_rgb, (M, N, 3), jnp.float32)
    dirs_all = jax.random.normal(k_dirs, (M, N, 3), jnp.float32)
    mask_all = jax.random.bernoulli(k_mask, 0.7, (M, N))
    view_dir = jax.random.normal(k_view, (N, 3), jnp.float32)

    out = model.forward(x, rgb_all, dirs_all, mask_all, view_dir)
    out = jax.block_until_ready(out)

    ref = model.forward_ref(x, rgb_all, dirs_all, mask_all, view_dir)
    assert out.shape == (N, 3)
    # bf16 matmul operands with f32 accumulation vs full-f32 reference -> loosened tolerance.
    assert jnp.allclose(out, ref, atol=3e-2, rtol=3e-2), "mismatch vs reference"

    print("KERNEL_OK")
</pallas_src>

<mosaic_0001>
module attributes {stable_mosaic.version = 11 : i64} {
  func.func @_posterior_kernel(%arg0: i32, %arg1: memref<16x27xbf16, #tpu.memory_space<vmem>>, %arg2: memref<16x3xf32, #tpu.memory_space<vmem>>, %arg3: memref<3x32xf32, #tpu.memory_space<vmem>>, %arg4: memref<27x128xbf16, #tpu.memory_space<vmem>>, %arg5: memref<32x128xbf16, #tpu.memory_space<vmem>>, %arg6: memref<32x128xbf16, #tpu.memory_space<vmem>>, %arg7: memref<1x128xf32, #tpu.memory_space<vmem>>, %arg8: memref<128x128xbf16, #tpu.memory_space<vmem>>, %arg9: memref<1x128xf32, #tpu.memory_space<vmem>>, %arg10: memref<128x128xbf16, #tpu.memory_space<vmem>>, %arg11: memref<1x128xf32, #tpu.memory_space<vmem>>, %arg12: memref<8x128xbf16, #tpu.memory_space<vmem>>, %arg13: memref<8x1xf32, #tpu.memory_space<vmem>>, %arg14: memref<8x16xf32, #tpu.memory_space<vmem>>) attributes {dimension_semantics = [#tpu.dimension_semantics<parallel>], iteration_bounds = array<i64: 1>, scalar_prefetch = 0 : i64, scratch_operands = 0 : i64, tpu.core_type = #tpu.core_type<tc>, window_params = [{transform_indices = @transform_0, window_bounds = array<i64: 16, 27>}, {transform_indices = @transform_1, window_bounds = array<i64: 16, 3>}, {pipeline_mode = #tpu.pipeline_mode<synchronous>, transform_indices = @transform_2, window_bounds = array<i64: 3, 32>}, {pipeline_mode = #tpu.pipeline_mode<synchronous>, transform_indices = @transform_3, window_bounds = array<i64: 27, 128>}, {pipeline_mode = #tpu.pipeline_mode<synchronous>, transform_indices = @transform_4, window_bounds = array<i64: 32, 128>}, {pipeline_mode = #tpu.pipeline_mode<synchronous>, transform_indices = @transform_5, window_bounds = array<i64: 32, 128>}, {pipeline_mode = #tpu.pipeline_mode<synchronous>, transform_indices = @transform_6, window_bounds = array<i64: 1, 128>}, {pipeline_mode = #tpu.pipeline_mode<synchronous>, transform_indices = @transform_7, window_bounds = array<i64: 128, 128>}, {pipeline_mode = #tpu.pipeline_mode<synchronous>, transform_indices = @transform_8, window_bounds = array<i64: 1, 128>}, {pipeline_mode = #tpu.pipeline_mode<synchronous>, transform_indices = @transform_9, window_bounds = array<i64: 128, 128>}, {pipeline_mode = #tpu.pipeline_mode<synchronous>, transform_indices = @transform_10, window_bounds = array<i64: 1, 128>}, {pipeline_mode = #tpu.pipeline_mode<synchronous>, transform_indices = @transform_11, window_bounds = array<i64: 8, 128>}, {pipeline_mode = #tpu.pipeline_mode<synchronous>, transform_indices = @transform_12, window_bounds = array<i64: 8, 1>}, {transform_indices = @transform_13, window_bounds = array<i64: 8, 16>}]} {
    %c0 = arith.constant 0 : index
    %c0_0 = arith.constant 0 : index
    %0 = vector.load %arg2[%c0, %c0_0] : memref<16x3xf32, #tpu.memory_space<vmem>>, vector<16x3xf32>
    %c0_1 = arith.constant 0 : index
    %c0_2 = arith.constant 0 : index
    %1 = vector.load %arg3[%c0_1, %c0_2] : memref<3x32xf32, #tpu.memory_space<vmem>>, vector<3x32xf32>
    %2 = vector.extract_strided_slice %0 {offsets = [0, 0], sizes = [16, 1], strides = [1, 1]} : vector<16x3xf32> to vector<16x1xf32>
    %3 = vector.extract_strided_slice %1 {offsets = [0, 0], sizes = [1, 32], strides = [1, 1]} : vector<3x32xf32> to vector<1x32xf32>
    %4 = vector.broadcast %2 : vector<16x1xf32> to vector<16x32xf32>
    %5 = vector.broadcast %3 : vector<1x32xf32> to vector<16x32xf32>
    %6 = arith.mulf %4, %5 : vector<16x32xf32>
    %7 = vector.extract_strided_slice %0 {offsets = [0, 1], sizes = [16, 1], strides = [1, 1]} : vector<16x3xf32> to vector<16x1xf32>
    %8 = vector.extract_strided_slice %1 {offsets = [1, 0], sizes = [1, 32], strides = [1, 1]} : vector<3x32xf32> to vector<1x32xf32>
    %9 = vector.broadcast %7 : vector<16x1xf32> to vector<16x32xf32>
    %10 = vector.broadcast %8 : vector<1x32xf32> to vector<16x32xf32>
    %11 = arith.mulf %9, %10 : vector<16x32xf32>
    %12 = arith.addf %6, %11 : vector<16x32xf32>
    %13 = vector.extract_strided_slice %0 {offsets = [0, 2], sizes = [16, 1], strides = [1, 1]} : vector<16x3xf32> to vector<16x1xf32>
    %14 = vector.extract_strided_slice %1 {offsets = [2, 0], sizes = [1, 32], strides = [1, 1]} : vector<3x32xf32> to vector<1x32xf32>
    %15 = vector.broadcast %13 : vector<16x1xf32> to vector<16x32xf32>
    %16 = vector.broadcast %14 : vector<1x32xf32> to vector<16x32xf32>
    %17 = arith.mulf %15, %16 : vector<16x32xf32>
    %18 = arith.addf %12, %17 : vector<16x32xf32>
    %19 = math.sin %18 : vector<16x32xf32>
    %20 = arith.truncf %19 : vector<16x32xf32> to vector<16x32xbf16>
    %21 = math.cos %18 : vector<16x32xf32>
    %22 = arith.truncf %21 : vector<16x32xf32> to vector<16x32xbf16>
    %c0_3 = arith.constant 0 : index
    %c0_4 = arith.constant 0 : index
    %23 = vector.load %arg1[%c0_3, %c0_4] : memref<16x27xbf16, #tpu.memory_space<vmem>>, vector<16x27xbf16>
    %c0_5 = arith.constant 0 : index
    %c0_6 = arith.constant 0 : index
    %24 = vector.load %arg4[%c0_5, %c0_6] : memref<27x128xbf16, #tpu.memory_space<vmem>>, vector<27x128xbf16>
    %cst = arith.constant dense<0.000000e+00> : vector<16x128xf32>
    %25 = tpu.matmul %23, %24, %cst {dimension_numbers = #tpu.dot_dimension_numbers<[1], [0], [0], [1], [0, 0, 1, 1], [], []>} : vector<16x27xbf16>, vector<27x128xbf16>, vector<16x128xf32> -> vector<16x128xf32>
    %c0_7 = arith.constant 0 : index
    %c0_8 = arith.constant 0 : index
    %26 = vector.load %arg5[%c0_7, %c0_8] : memref<32x128xbf16, #tpu.memory_space<vmem>>, vector<32x128xbf16>
    %cst_9 = arith.constant dense<0.000000e+00> : vector<16x128xf32>
    %27 = tpu.matmul %20, %26, %cst_9 {dimension_numbers = #tpu.dot_dimension_numbers<[1], [0], [0], [1], [0, 0, 1, 1], [], []>} : vector<16x32xbf16>, vector<32x128xbf16>, vector<16x128xf32> -> vector<16x128xf32>
    %28 = arith.addf %25, %27 : vector<16x128xf32>
    %c0_10 = arith.constant 0 : index
    %c0_11 = arith.constant 0 : index
    %29 = vector.load %arg6[%c0_10, %c0_11] : memref<32x128xbf16, #tpu.memory_space<vmem>>, vector<32x128xbf16>
    %cst_12 = arith.constant dense<0.000000e+00> : vector<16x128xf32>
    %30 = tpu.matmul %22, %29, %cst_12 {dimension_numbers = #tpu.dot_dimension_numbers<[1], [0], [0], [1], [0, 0, 1, 1], [], []>} : vector<16x32xbf16>, vector<32x128xbf16>, vector<16x128xf32> -> vector<16x128xf32>
    %31 = arith.addf %28, %30 : vector<16x128xf32>
    %c0_13 = arith.constant 0 : index
    %c0_14 = arith.constant 0 : index
    %32 = vector.load %arg7[%c0_13, %c0_14] : memref<1x128xf32, #tpu.memory_space<vmem>>, vector<1x128xf32>
    %33 = vector.broadcast %32 : vector<1x128xf32> to vector<16x128xf32>
    %34 = arith.addf %31, %33 : vector<16x128xf32>
    %cst_15 = arith.constant 0.000000e+00 : f32
    %35 = vector.broadcast %cst_15 : f32 to vector<16x128xf32>
    %36 = arith.maximumf %34, %35 : vector<16x128xf32>
    %37 = arith.truncf %36 : vector<16x128xf32> to vector<16x128xbf16>
    %c0_16 = arith.constant 0 : index
    %c0_17 = arith.constant 0 : index
    %38 = vector.load %arg8[%c0_16, %c0_17] : memref<128x128xbf16, #tpu.memory_space<vmem>>, vector<128x128xbf16>
    %cst_18 = arith.constant dense<0.000000e+00> : vector<16x128xf32>
    %39 = tpu.matmul %37, %38, %cst_18 {dimension_numbers = #tpu.dot_dimension_numbers<[1], [0], [0], [1], [0, 0, 1, 1], [], []>} : vector<16x128xbf16>, vector<128x128xbf16>, vector<16x128xf32> -> vector<16x128xf32>
    %c0_19 = arith.constant 0 : index
    %c0_20 = arith.constant 0 : index
    %40 = vector.load %arg9[%c0_19, %c0_20] : memref<1x128xf32, #tpu.memory_space<vmem>>, vector<1x128xf32>
    %41 = vector.broadcast %40 : vector<1x128xf32> to vector<16x128xf32>
    %42 = arith.addf %39, %41 : vector<16x128xf32>
    %cst_21 = arith.constant 0.000000e+00 : f32
    %43 = vector.broadcast %cst_21 : f32 to vector<16x128xf32>
    %44 = arith.maximumf %42, %43 : vector<16x128xf32>
    %45 = arith.truncf %44 : vector<16x128xf32> to vector<16x128xbf16>
    %c0_22 = arith.constant 0 : index
    %c0_23 = arith.constant 0 : index
    %46 = vector.load %arg10[%c0_22, %c0_23] : memref<128x128xbf16, #tpu.memory_space<vmem>>, vector<128x128xbf16>
    %cst_24 = arith.constant dense<0.000000e+00> : vector<16x128xf32>
    %47 = tpu.matmul %45, %46, %cst_24 {dimension_numbers = #tpu.dot_dimension_numbers<[1], [0], [0], [1], [0, 0, 1, 1], [], []>} : vector<16x128xbf16>, vector<128x128xbf16>, vector<16x128xf32> -> vector<16x128xf32>
    %c0_25 = arith.constant 0 : index
    %c0_26 = arith.constant 0 : index
    %48 = vector.load %arg11[%c0_25, %c0_26] : memref<1x128xf32, #tpu.memory_space<vmem>>, vector<1x128xf32>
    %49 = vector.broadcast %48 : vector<1x128xf32> to vector<16x128xf32>
    %50 = arith.addf %47, %49 : vector<16x128xf32>
    %cst_27 = arith.constant 0.000000e+00 : f32
    %51 = vector.broadcast %cst_27 : f32 to vector<16x128xf32>
    %52 = arith.maximumf %50, %51 : vector<16x128xf32>
    %c0_28 = arith.constant 0 : index
    %c0_29 = arith.constant 0 : index
    %53 = vector.load %arg12[%c0_28, %c0_29] : memref<8x128xbf16, #tpu.memory_space<vmem>>, vector<8x128xbf16>
    %54 = arith.truncf %52 : vector<16x128xf32> to vector<16x128xbf16>
    %cst_30 = arith.constant dense<0.000000e+00> : vector<8x16xf32>
    %55 = tpu.matmul %53, %54, %cst_30 {dimension_numbers = #tpu.dot_dimension_numbers<[1], [1], [0], [0], [0, 0, 1, 0], [], []>} : vector<8x128xbf16>, vector<16x128xbf16>, vector<8x16xf32> -> vector<8x16xf32>
    %c0_31 = arith.constant 0 : index
    %c0_32 = arith.constant 0 : index
    %56 = vector.load %arg13[%c0_31, %c0_32] : memref<8x1xf32, #tpu.memory_space<vmem>>, vector<8x1xf32>
    %57 = vector.broadcast %56 : vector<8x1xf32> to vector<8x16xf32>
    %58 = arith.addf %55, %57 : vector<8x16xf32>
    %c0_33 = arith.constant 0 : index
    %c0_34 = arith.constant 0 : index
    %59 = vector.load %arg14[%c0_33, %c0_34] : memref<8x16xf32, #tpu.memory_space<vmem>>, vector<8x16xf32>
    tpu.vector_store %arg14[%c0_33, %c0_34], %58 {strides = array<i32>} : memref<8x16xf32, #tpu.memory_space<vmem>>, vector<8x16xf32>,
    return
  }
  func.func @transform_0(%arg0: i32) -> (i32, i32) {
    %c0_i32 = arith.constant 0 : i32
    %c0_i32_0 = arith.constant 0 : i32
    return %arg0, %c0_i32 : i32, i32
  }
  func.func @transform_1(%arg0: i32) -> (i32, i32) {
    %c0_i32 = arith.constant 0 : i32
    %c0_i32_0 = arith.constant 0 : i32
    return %arg0, %c0_i32 : i32, i32
  }
  func.func @transform_2(%arg0: i32) -> (i32, i32) {
    %c0_i32 = arith.constant 0 : i32
    %c0_i32_0 = arith.constant 0 : i32
    %c0_i32_1 = arith.constant 0 : i32
    return %c0_i32, %c0_i32_0 : i32, i32
  }
  func.func @transform_3(%arg0: i32) -> (i32, i32) {
    %c0_i32 = arith.constant 0 : i32
    %c0_i32_0 = arith.constant 0 : i32
    %c0_i32_1 = arith.constant 0 : i32
    return %c0_i32, %c0_i32_0 : i32, i32
  }
  func.func @transform_4(%arg0: i32) -> (i32, i32) {
    %c0_i32 = arith.constant 0 : i32
    %c0_i32_0 = arith.constant 0 : i32
    %c0_i32_1 = arith.constant 0 : i32
    return %c0_i32, %c0_i32_0 : i32, i32
  }
  func.func @transform_5(%arg0: i32) -> (i32, i32) {
    %c0_i32 = arith.constant 0 : i32
    %c0_i32_0 = arith.constant 0 : i32
    %c0_i32_1 = arith.constant 0 : i32
    return %c0_i32, %c0_i32_0 : i32, i32
  }
  func.func @transform_6(%arg0: i32) -> (i32, i32) {
    %c0_i32 = arith.constant 0 : i32
    %c0_i32_0 = arith.constant 0 : i32
    %c0_i32_1 = arith.constant 0 : i32
    return %c0_i32, %c0_i32_0 : i32, i32
  }
  func.func @transform_7(%arg0: i32) -> (i32, i32) {
    %c0_i32 = arith.constant 0 : i32
    %c0_i32_0 = arith.constant 0 : i32
    %c0_i32_1 = arith.constant 0 : i32
    return %c0_i32, %c0_i32_0 : i32, i32
  }
  func.func @transform_8(%arg0: i32) -> (i32, i32) {
    %c0_i32 = arith.constant 0 : i32
    %c0_i32_0 = arith.constant 0 : i32
    %c0_i32_1 = arith.constant 0 : i32
    return %c0_i32, %c0_i32_0 : i32, i32
  }
  func.func @transform_9(%arg0: i32) -> (i32, i32) {
    %c0_i32 = arith.constant 0 : i32
    %c0_i32_0 = arith.constant 0 : i32
    %c0_i32_1 = arith.constant 0 : i32
    return %c0_i32, %c0_i32_0 : i32, i32
  }
  func.func @transform_10(%arg0: i32) -> (i32, i32) {
    %c0_i32 = arith.constant 0 : i32
    %c0_i32_0 = arith.constant 0 : i32
    %c0_i32_1 = arith.constant 0 : i32
    return %c0_i32, %c0_i32_0 : i32, i32
  }
  func.func @transform_11(%arg0: i32) -> (i32, i32) {
    %c0_i32 = arith.constant 0 : i32
    %c0_i32_0 = arith.constant 0 : i32
    %c0_i32_1 = arith.constant 0 : i32
    return %c0_i32, %c0_i32_0 : i32, i32
  }
  func.func @transform_12(%arg0: i32) -> (i32, i32) {
    %c0_i32 = arith.constant 0 : i32
    %c0_i32_0 = arith.constant 0 : i32
    %c0_i32_1 = arith.constant 0 : i32
    return %c0_i32, %c0_i32_0 : i32, i32
  }
  func.func @transform_13(%arg0: i32) -> (i32, i32) {
    %c0_i32 = arith.constant 0 : i32
    %c0_i32_0 = arith.constant 0 : i32
    return %c0_i32, %arg0 : i32, i32
  }
}

</mosaic_0001>

<llo_original>
// kernel: posterior_forward.1
$region0: #{posterior_forward.1}
  #allocation0 [shape = 'u32[]', space=smem, size = 0x4, offset = 0x4, fixed_abs, tag = 'smem constant byte address 0x4 - core index']
  #allocation1 [shape = 'u32[144,128]{1,0:T(1,128)}', space=vmem, size = 0x12000, scoped, tag = 'internal scratch']
  %s0 = inlined_call_operand.vmem [shape: bf16[16,27], index: 0, kind: input, shape index: {}]
  %s1 = inlined_call_operand.vmem [shape: f32[16,3], index: 1, kind: input, shape index: {}]
  %s2 = inlined_call_operand.vmem [shape: f32[3,32], index: 2, kind: input, shape index: {}]
  %s3 = inlined_call_operand.vmem [shape: bf16[27,128], index: 3, kind: input, shape index: {}]
  %s4 = inlined_call_operand.vmem [shape: bf16[32,128], index: 4, kind: input, shape index: {}]
  %s5 = inlined_call_operand.vmem [shape: bf16[32,128], index: 5, kind: input, shape index: {}]
  %s6 = inlined_call_operand.vmem [shape: f32[1,128], index: 6, kind: input, shape index: {}]
  %s7 = inlined_call_operand.vmem [shape: bf16[128,128], index: 7, kind: input, shape index: {}]
  %s8 = inlined_call_operand.vmem [shape: f32[1,128], index: 8, kind: input, shape index: {}]
  %s9 = inlined_call_operand.vmem [shape: bf16[128,128], index: 9, kind: input, shape index: {}]
  %s10 = inlined_call_operand.vmem [shape: f32[1,128], index: 10, kind: input, shape index: {}]
  %s11 = inlined_call_operand.vmem [shape: bf16[8,128], index: 11, kind: input, shape index: {}]
  %s12 = inlined_call_operand.vmem [shape: f32[8,1], index: 12, kind: input, shape index: {}]
  %s13 = inlined_call_operand.vmem [shape: f32[8,16], index: 13, kind: output, shape index: {}]
  %s14 = sld [smem:[#allocation0]]
  $region62: #{posterior_forward.1} parent=0
    _
  %s16 = ssub.s32 1, %s14
  %s17 = scalar_select 0, %s16, %s14
  // Predicated region
  $region2: #{posterior_forward.1} parent=0 // pred_check
    _
  $region3: #{posterior_forward.1} parent=0 // pred_check_branch
    %19 = sbr.rel (0) target = $region5
  $region4: #{posterior_forward.1} parent=0 // pred_region
    _
  $region5: #{posterior_forward.1} parent=0 // pred_fallthru
    _
  // Predicated region
  $region6: #{posterior_forward.1} parent=0 // pred_check
    _
  $region7: #{posterior_forward.1} parent=0 // pred_check_branch
    %21 = sbr.rel (0) target = $region9
  $region8: #{posterior_forward.1} parent=0 // pred_region
    _
  $region9: #{posterior_forward.1} parent=0 // pred_fallthru
    _
  // Predicated region
  $region10: #{posterior_forward.1} parent=0 // pred_check
    _
  $region11: #{posterior_forward.1} parent=0 // pred_check_branch
    %23 = sbr.rel (0) target = $region13
  $region12: #{posterior_forward.1} parent=0 // pred_region
    _
  $region13: #{posterior_forward.1} parent=0 // pred_fallthru
    _
  // Predicated region
  $region14: #{posterior_forward.1} parent=0 // pred_check
    _
  $region15: #{posterior_forward.1} parent=0 // pred_check_branch
    %25 = sbr.rel (0) target = $region17
  $region16: #{posterior_forward.1} parent=0 // pred_region
    _
  $region17: #{posterior_forward.1} parent=0 // pred_fallthru
    _
  // Predicated region
  $region18: #{posterior_forward.1} parent=0 // pred_check
    _
  $region19: #{posterior_forward.1} parent=0 // pred_check_branch
    %27 = sbr.rel (0) target = $region21
  $region20: #{posterior_forward.1} parent=0 // pred_region
    _
  $region21: #{posterior_forward.1} parent=0 // pred_fallthru
    _
  // Predicated region
  $region22: #{posterior_forward.1} parent=0 // pred_check
    _
  $region23: #{posterior_forward.1} parent=0 // pred_check_branch
    %29 = sbr.rel (0) target = $region25
  $region24: #{posterior_forward.1} parent=0 // pred_region
    _
  $region25: #{posterior_forward.1} parent=0 // pred_fallthru
    _
  // Predicated region
  $region26: #{posterior_forward.1} parent=0 // pred_check
    _
  $region27: #{posterior_forward.1} parent=0 // pred_check_branch
    %31 = sbr.rel (0) target = $region29
  $region28: #{posterior_forward.1} parent=0 // pred_region
    _
  $region29: #{posterior_forward.1} parent=0 // pred_fallthru
    _
  // Predicated region
  $region30: #{posterior_forward.1} parent=0 // pred_check
    _
  $region31: #{posterior_forward.1} parent=0 // pred_check_branch
    %33 = sbr.rel (0) target = $region33
  $region32: #{posterior_forward.1} parent=0 // pred_region
    _
  $region33: #{posterior_forward.1} parent=0 // pred_fallthru
    _
  // Predicated region
  $region34: #{posterior_forward.1} parent=0 // pred_check
    _
  $region35: #{posterior_forward.1} parent=0 // pred_check_branch
    %35 = sbr.rel (0) target = $region37
  $region36: #{posterior_forward.1} parent=0 // pred_region
    _
  $region37: #{posterior_forward.1} parent=0 // pred_fallthru
    _
  // Predicated region
  $region38: #{posterior_forward.1} parent=0 // pred_check
    _
  $region39: #{posterior_forward.1} parent=0 // pred_check_branch
    %37 = sbr.rel (0) target = $region41
  $region40: #{posterior_forward.1} parent=0 // pred_region
    _
  $region41: #{posterior_forward.1} parent=0 // pred_fallthru
    _
  // Predicated region
  $region42: #{posterior_forward.1} parent=0 // pred_check
    _
  $region43: #{posterior_forward.1} parent=0 // pred_check_branch
    %39 = sbr.rel (0) target = $region45
  $region44: #{posterior_forward.1} parent=0 // pred_region
    _
  $region45: #{posterior_forward.1} parent=0 // pred_fallthru
    _
  // Predicated region
  $region46: #{posterior_forward.1} parent=0 // pred_check
    _
  $region47: #{posterior_forward.1} parent=0 // pred_check_branch
    %41 = sbr.rel (0) target = $region49
  $region48: #{posterior_forward.1} parent=0 // pred_region
    _
  $region49: #{posterior_forward.1} parent=0 // pred_fallthru
    _
  // Predicated region
  $region50: #{posterior_forward.1} parent=0 // pred_check
    _
  $region51: #{posterior_forward.1} parent=0 // pred_check_branch
    %43 = sbr.rel (0) target = $region53
  $region52: #{posterior_forward.1} parent=0 // pred_region
    _
  $region53: #{posterior_forward.1} parent=0 // pred_fallthru
    _
  %v45 = vld [vmem:[%s1] sm:$0xff]
  %v46 = vld [vmem:[%s1 + $0x8] sm:$0xff]
  %v47 = vld [vmem:[%s2] sm:$0x7]
  %49 = vset.pattern.permute.xlu0 0
  %50 = vperm.xlu0 %49, %v45
  %v51 = vpop.permute.xlu0 %50
  %54 = vset.pattern.permute.xlu0 0
  %55 = vperm.xlu0 %54, %v46
  %v56 = vpop.permute.xlu0 %55
  %v58 = vlaneseq
  %v59 = vshrl.u32 %v58, 7
  %v60 = vsub.s32 0, %v59
  %v61 = vrot.slane %v47, %v60
  %v62 = vmul.f32 %v51, %v61
  %v63 = vmul.f32 %v56, %v61
  %64 = vset.pattern.permute.xlu0 1
  %65 = vperm.xlu0 %64, %v45
  %v66 = vpop.permute.xlu0 %65
  %68 = vset.pattern.permute.xlu0 1
  %69 = vperm.xlu0 %68, %v46
  %v70 = vpop.permute.xlu0 %69
  %v72 = vlaneseq
  %v73 = vshrl.u32 %v72, 7
  %v74 = vsub.s32 1, %v73
  %v75 = vrot.slane %v47, %v74
  %v76 = vmul.f32 %v66, %v75
  %v77 = vmul.f32 %v70, %v75
  %v78 = vadd.f32 %v62, %v76
  %v79 = vadd.f32 %v63, %v77
  %80 = vset.pattern.permute.xlu0 2
  %81 = vperm.xlu0 %80, %v45
  %v82 = vpop.permute.xlu0 %81
  %84 = vset.pattern.permute.xlu0 2
  %85 = vperm.xlu0 %84, %v46
  %v86 = vpop.permute.xlu0 %85
  %v88 = vlaneseq
  %v89 = vshrl.u32 %v88, 7
  %v90 = vsub.s32 2, %v89
  %v91 = vrot.slane %v47, %v90
  %v92 = vmul.f32 %v82, %v91
  %v93 = vmul.f32 %v86, %v91
  %v94 = vadd.f32 %v78, %v92
  %v95 = vadd.f32 %v79, %v93
  %v96 = vand.u32 2147483647, %v94
  %vm97 = vcmp.le.f32.partialorder %v96, 0.7853982
  %vm98 = vcmp.lt.s32.totalorder %v94, 0
  %v99 = vand.u32 %v94, 2139095040
  %v100 = vshrl.u32 %v99, 23
  %v101 = vsub.s32 %v100, 127
  %v102 = vand.u32 2147483647, %v94
  %v103 = vand.u32 %v102, 8388607
  %v104 = vor.u32 %v103, 8388608
  %v105 = vsub.s32 0, %v104
  %v106 = vadd.s32 %v101, 1
  %vm107 = vcmp.gt.s32.totalorder %v106, 0
  %v108 = vsel %vm107, %v106, 0
  %v109 = vshrl.u32 %v108, 5
  %v110 = vand.u32 %v108, 31
  %v111 = vsub.s32 32, %v110
  %v112 = vshrl.u32 683565275, %v111
  %v113 = vshll.u32 683565275, %v110
  %v114 = vshrl.u32 2475754826, %v111
  %v115 = vor.u32 %v113, %v114
  %v116 = vshll.u32 2475754826, %v110
  %v117 = vshrl.u32 2131351028, %v111
  %v118 = vor.u32 %v116, %v117
  %v119 = vshll.u32 2131351028, %v110
  %v120 = vshrl.u32 2102212464, %v111
  %v121 = vor.u32 %v119, %v120
  %v122 = vshll.u32 2102212464, %v110
  %v123 = vshrl.u32 920167782, %v111
  %v124 = vor.u32 %v122, %v123
  %v125 = vshll.u32 920167782, %v110
  %v126 = vshrl.u32 1326507024, %v111
  %v127 = vor.u32 %v125, %v126
  %vm128 = vcmp.lt.s32.totalorder %v109, 1
  %vm129 = vcmp.lt.s32.totalorder %v109, 2
  %vm130 = vcmp.lt.s32.totalorder %v109, 3
  %vm131 = vcmp.lt.s32.totalorder %v109, 4
  %v132 = vsel %vm128, %v112, %v115
  %v133 = vsel %vm131, %v121, 2102212464
  %v134 = vsel %vm130, %v118, %v133
  %v135 = vsel %vm129, %v132, %v134
  %v136 = vsel %vm128, %v115, %v118
  %v137 = vsel %vm131, %v124, 920167782
  %v138 = vsel %vm130, %v121, %v137
  %v139 = vsel %vm129, %v136, %v138
  %v140 = vsel %vm128, %v118, %v121
  %v141 = vsel %vm131, %v127, 1326507024
  %v142 = vsel %vm130, %v124, %v141
  %v143 = vsel %vm129, %v140, %v142
  %v144 = vshll.u32 %v104, 8
  %v145 = vmul.u32.u64.compose %v144, %v143
  %v146 = vextract.low.u32 %v145
  %v147 = vextract.high.u32 %v145
  %v148 = vmul.u32.u64.compose %v144, %v139
  %v149 = vextract.low.u32 %v148
  %v150 = vextract.high.u32 %v148
  %v151 = vmul.u32 %v144, %v135
  %v152 = vadd.s32 %v147, %v149
  %vm153 = vc.u32 %v147, %v149
  %v154 = vadd.s32 %v150, 1
  %v155 = vsel %vm153, %v154, %v150
  %v156 = vadd.s32 %v151, %v155
  %v157 = vadd.s32 %v156, 536870912
  %v158 = vshrl.u32 %v157, 30
  %v159 = vshll.u32 %v158, 30
  %v160 = vsub.s32 %v156, %v159
  %vm161 = vcmp.lt.s32.totalorder %v160, 0
  %v162 = vsub.s32 0, %v160
  %v163 = vsel %vm161, %v162, %v160
  %v164 = vclz %v163
  %v165 = vsub.s32 %v164, 2
  %vm166 = vcmp.gt.s32.totalorder 0, %v165
  %v167 = vsel %vm166, 0, %v165
  %v168 = vsub.s32 32, %v167
  %v169 = vshll.u32 %v160, %v167
  %v170 = vshrl.u32 %v152, %v168
  %v171 = vor.u32 %v169, %v170
  %v172 = vsub.s32 4294967266, %v167
  %v173 = vadd.s32 %v172, 127
  %v174 = vshll.u32 %v173, 23
  %v175 = vor.u32 4788187, %v174
  %v176 = vand.u32 2147483647, %v175
  %v178 = vcvt.s32.f32 %v171
  %v179 = vmul.f32 %v178, %v176
  %v180 = vxor.u32 %v179, 2147483648
  %v181 = vsel %vm98, %v180, %v179
  %v182 = vsub.s32 4, %v158
  %v183 = vsel %vm98, %v182, %v158
  %v184 = vsel %vm97, %v94, %v181
  %v185 = vsel %vm97, 0, %v183
  %v186 = vcosq.f32.pop %v184
  %v187 = vsinq.f32.pop %v184
  %vm188 = vweird.f32 %v94
  %v189 = vadd.s32 %v185, 3
  %v190 = vand.u32 %v189, 3
  %vm191 = vcmp.lt.s32.totalorder %v190, 2
  %vm192 = vcmp.eq.s32.totalorder %v190, 0
  %v193 = vxor.u32 %v187, 2147483648
  %v194 = vsel %vm192, %v186, %v193
  %vm195 = vcmp.eq.s32.totalorder %v190, 2
  %v196 = vxor.u32 %v186, 2147483648
  %v197 = vsel %vm195, %v196, %v187
  %v198 = vsel %vm191, %v194, %v197
  %v199 = vsel %vm188, nan, %v198
  %v200 = vand.u32 2147483647, %v95
  %vm201 = vcmp.le.f32.partialorder %v200, 0.7853982
  %vm202 = vcmp.lt.s32.totalorder %v95, 0
  %v203 = vand.u32 %v95, 2139095040
  %v204 = vshrl.u32 %v203, 23
  %v205 = vsub.s32 %v204, 127
  %v206 = vand.u32 2147483647, %v95
  %v207 = vand.u32 %v206, 8388607
  %v208 = vor.u32 %v207, 8388608
  %v209 = vsub.s32 0, %v208
  %v210 = vadd.s32 %v205, 1
  %vm211 = vcmp.gt.s32.totalorder %v210, 0
  %v212 = vsel %vm211, %v210, 0
  %v213 = vshrl.u32 %v212, 5
  %v214 = vand.u32 %v212, 31
  %v215 = vsub.s32 32, %v214
  %v216 = vshrl.u32 683565275, %v215
  %v217 = vshll.u32 683565275, %v214
  %v218 = vshrl.u32 2475754826, %v215
  %v219 = vor.u32 %v217, %v218
  %v220 = vshll.u32 2475754826, %v214
  %v221 = vshrl.u32 2131351028, %v215
  %v222 = vor.u32 %v220, %v221
  %v223 = vshll.u32 2131351028, %v214
  %v224 = vshrl.u32 2102212464, %v215
  %v225 = vor.u32 %v223, %v224
  %v226 = vshll.u32 2102212464, %v214
  %v227 = vshrl.u32 920167782, %v215
  %v228 = vor.u32 %v226, %v227
  %v229 = vshll.u32 920167782, %v214
  %v230 = vshrl.u32 1326507024, %v215
  %v231 = vor.u32 %v229, %v230
  %vm232 = vcmp.lt.s32.totalorder %v213, 1
  %vm233 = vcmp.lt.s32.totalorder %v213, 2
  %vm234 = vcmp.lt.s32.totalorder %v213, 3
  %vm235 = vcmp.lt.s32.totalorder %v213, 4
  %v236 = vsel %vm232, %v216, %v219
  %v237 = vsel %vm235, %v225, 2102212464
  %v238 = vsel %vm234, %v222, %v237
  %v239 = vsel %vm233, %v236, %v238
  %v240 = vsel %vm232, %v219, %v222
  %v241 = vsel %vm235, %v228, 920167782
  %v242 = vsel %vm234, %v225, %v241
  %v243 = vsel %vm233, %v240, %v242
  %v244 = vsel %vm232, %v222, %v225
  %v245 = vsel %vm235, %v231, 1326507024
  %v246 = vsel %vm234, %v228, %v245
  %v247 = vsel %vm233, %v244, %v246
  %v248 = vshll.u32 %v208, 8
  %v249 = vmul.u32.u64.compose %v248, %v247
  %v250 = vextract.low.u32 %v249
  %v251 = vextract.high.u32 %v249
  %v252 = vmul.u32.u64.compose %v248, %v243
  %v253 = vextract.low.u32 %v252
  %v254 = vextract.high.u32 %v252
  %v255 = vmul.u32 %v248, %v239
  %v256 = vadd.s32 %v251, %v253
  %vm257 = vc.u32 %v251, %v253
  %v258 = vadd.s32 %v254, 1
  %v259 = vsel %vm257, %v258, %v254
  %v260 = vadd.s32 %v255, %v259
  %v261 = vadd.s32 %v260, 536870912
  %v262 = vshrl.u32 %v261, 30
  %v263 = vshll.u32 %v262, 30
  %v264 = vsub.s32 %v260, %v263
  %vm265 = vcmp.lt.s32.totalorder %v264, 0
  %v266 = vsub.s32 0, %v264
  %v267 = vsel %vm265, %v266, %v264
  %v268 = vclz %v267
  %v269 = vsub.s32 %v268, 2
  %vm270 = vcmp.gt.s32.totalorder 0, %v269
  %v271 = vsel %vm270, 0, %v269
  %v272 = vsub.s32 32, %v271
  %v273 = vshll.u32 %v264, %v271
  %v274 = vshrl.u32 %v256, %v272
  %v275 = vor.u32 %v273, %v274
  %v276 = vsub.s32 4294967266, %v271
  %v277 = vadd.s32 %v276, 127
  %v278 = vshll.u32 %v277, 23
  %v279 = vor.u32 4788187, %v278
  %v280 = vand.u32 2147483647, %v279
  %v282 = vcvt.s32.f32 %v275
  %v283 = vmul.f32 %v282, %v280
  %v284 = vxor.u32 %v283, 2147483648
  %v285 = vsel %vm202, %v284, %v283
  %v286 = vsub.s32 4, %v262
  %v287 = vsel %vm202, %v286, %v262
  %v288 = vsel %vm201, %v95, %v285
  %v289 = vsel %vm201, 0, %v287
  %v290 = vcosq.f32.pop %v288
  %v291 = vsinq.f32.pop %v288
  %vm292 = vweird.f32 %v95
  %v293 = vadd.s32 %v289, 3
  %v294 = vand.u32 %v293, 3
  %vm295 = vcmp.lt.s32.totalorder %v294, 2
  %vm296 = vcmp.eq.s32.totalorder %v294, 0
  %v297 = vxor.u32 %v291, 2147483648
  %v298 = vsel %vm296, %v290, %v297
  %vm299 = vcmp.eq.s32.totalorder %v294, 2
  %v300 = vxor.u32 %v290, 2147483648
  %v301 = vsel %vm299, %v300, %v291
  %v302 = vsel %vm295, %v298, %v301
  %v303 = vsel %vm292, nan, %v302
  %v304 = vpack.c.bf16 %v303, %v199
  %v305 = vand.u32 2147483647, %v94
  %vm306 = vcmp.le.f32.partialorder %v305, 0.7853982
  %vm307 = vcmp.lt.s32.totalorder %v94, 0
  %v308 = vand.u32 %v94, 2139095040
  %v309 = vshrl.u32 %v308, 23
  %v310 = vsub.s32 %v309, 127
  %v311 = vand.u32 2147483647, %v94
  %v312 = vand.u32 %v311, 8388607
  %v313 = vor.u32 %v312, 8388608
  %v314 = vsub.s32 0, %v313
  %v315 = vadd.s32 %v310, 1
  %vm316 = vcmp.gt.s32.totalorder %v315, 0
  %v317 = vsel %vm316, %v315, 0
  %v318 = vshrl.u32 %v317, 5
  %v319 = vand.u32 %v317, 31
  %v320 = vsub.s32 32, %v319
  %v321 = vshrl.u32 683565275, %v320
  %v322 = vshll.u32 683565275, %v319
  %v323 = vshrl.u32 2475754826, %v320
  %v324 = vor.u32 %v322, %v323
  %v325 = vshll.u32 2475754826, %v319
  %v326 = vshrl.u32 2131351028, %v320
  %v327 = vor.u32 %v325, %v326
  %v328 = vshll.u32 2131351028, %v319
  %v329 = vshrl.u32 2102212464, %v320
  %v330 = vor.u32 %v328, %v329
  %v331 = vshll.u32 2102212464, %v319
  %v332 = vshrl.u32 920167782, %v320
  %v333 = vor.u32 %v331, %v332
  %v334 = vshll.u32 920167782, %v319
  %v335 = vshrl.u32 1326507024, %v320
  %v336 = vor.u32 %v334, %v335
  %vm337 = vcmp.lt.s32.totalorder %v318, 1
  %vm338 = vcmp.lt.s32.totalorder %v318, 2
  %vm339 = vcmp.lt.s32.totalorder %v318, 3
  %vm340 = vcmp.lt.s32.totalorder %v318, 4
  %v341 = vsel %vm337, %v321, %v324
  %v342 = vsel %vm340, %v330, 2102212464
  %v343 = vsel %vm339, %v327, %v342
  %v344 = vsel %vm338, %v341, %v343
  %v345 = vsel %vm337, %v324, %v327
  %v346 = vsel %vm340, %v333, 920167782
  %v347 = vsel %vm339, %v330, %v346
  %v348 = vsel %vm338, %v345, %v347
  %v349 = vsel %vm337, %v327, %v330
  %v350 = vsel %vm340, %v336, 1326507024
  %v351 = vsel %vm339, %v333, %v350
  %v352 = vsel %vm338, %v349, %v351
  %v353 = vshll.u32 %v313, 8
  %v354 = vmul.u32.u64.compose %v353, %v352
  %v355 = vextract.low.u32 %v354
  %v356 = vextract.high.u32 %v354
  %v357 = vmul.u32.u64.compose %v353, %v348
  %v358 = vextract.low.u32 %v357
  %v359 = vextract.high.u32 %v357
  %v360 = vmul.u32 %v353, %v344
  %v361 = vadd.s32 %v356, %v358
  %vm362 = vc.u32 %v356, %v358
  %v363 = vadd.s32 %v359, 1
  %v364 = vsel %vm362, %v363, %v359
  %v365 = vadd.s32 %v360, %v364
  %v366 = vadd.s32 %v365, 536870912
  %v367 = vshrl.u32 %v366, 30
  %v368 = vshll.u32 %v367, 30
  %v369 = vsub.s32 %v365, %v368
  %vm370 = vcmp.lt.s32.totalorder %v369, 0
  %v371 = vsub.s32 0, %v369
  %v372 = vsel %vm370, %v371, %v369
  %v373 = vclz %v372
  %v374 = vsub.s32 %v373, 2
  %vm375 = vcmp.gt.s32.totalorder 0, %v374
  %v376 = vsel %vm375, 0, %v374
  %v377 = vsub.s32 32, %v376
  %v378 = vshll.u32 %v369, %v376
  %v379 = vshrl.u32 %v361, %v377
  %v380 = vor.u32 %v378, %v379
  %v381 = vsub.s32 4294967266, %v376
  %v382 = vadd.s32 %v381, 127
  %v383 = vshll.u32 %v382, 23
  %v384 = vor.u32 4788187, %v383
  %v385 = vand.u32 2147483647, %v384
  %v387 = vcvt.s32.f32 %v380
  %v388 = vmul.f32 %v387, %v385
  %v389 = vxor.u32 %v388, 2147483648
  %v390 = vsel %vm307, %v389, %v388
  %v391 = vsub.s32 4, %v367
  %v392 = vsel %vm307, %v391, %v367
  %v393 = vsel %vm306, %v94, %v390
  %v394 = vsel %vm306, 0, %v392
  %v395 = vcosq.f32.pop %v393
  %v396 = vsinq.f32.pop %v393
  %vm397 = vweird.f32 %v94
  %v398 = vand.u32 %v394, 3
  %vm399 = vcmp.lt.s32.totalorder %v398, 2
  %vm400 = vcmp.eq.s32.totalorder %v398, 0
  %v401 = vxor.u32 %v396, 2147483648
  %v402 = vsel %vm400, %v395, %v401
  %vm403 = vcmp.eq.s32.totalorder %v398, 2
  %v404 = vxor.u32 %v395, 2147483648
  %v405 = vsel %vm403, %v404, %v396
  %v406 = vsel %vm399, %v402, %v405
  %v407 = vsel %vm397, nan, %v406
  %v408 = vand.u32 2147483647, %v95
  %vm409 = vcmp.le.f32.partialorder %v408, 0.7853982
  %vm410 = vcmp.lt.s32.totalorder %v95, 0
  %v411 = vand.u32 %v95, 2139095040
  %v412 = vshrl.u32 %v411, 23
  %v413 = vsub.s32 %v412, 127
  %v414 = vand.u32 2147483647, %v95
  %v415 = vand.u32 %v414, 8388607
  %v416 = vor.u32 %v415, 8388608
  %v417 = vsub.s32 0, %v416
  %v418 = vadd.s32 %v413, 1
  %vm419 = vcmp.gt.s32.totalorder %v418, 0
  %v420 = vsel %vm419, %v418, 0
  %v421 = vshrl.u32 %v420, 5
  %v422 = vand.u32 %v420, 31
  %v423 = vsub.s32 32, %v422
  %v424 = vshrl.u32 683565275, %v423
  %v425 = vshll.u32 683565275, %v422
  %v426 = vshrl.u32 2475754826, %v423
  %v427 = vor.u32 %v425, %v426
  %v428 = vshll.u32 2475754826, %v422
  %v429 = vshrl.u32 2131351028, %v423
  %v430 = vor.u32 %v428, %v429
  %v431 = vshll.u32 2131351028, %v422
  %v432 = vshrl.u32 2102212464, %v423
  %v433 = vor.u32 %v431, %v432
  %v434 = vshll.u32 2102212464, %v422
  %v435 = vshrl.u32 920167782, %v423
  %v436 = vor.u32 %v434, %v435
  %v437 = vshll.u32 920167782, %v422
  %v438 = vshrl.u32 1326507024, %v423
  %v439 = vor.u32 %v437, %v438
  %vm440 = vcmp.lt.s32.totalorder %v421, 1
  %vm441 = vcmp.lt.s32.totalorder %v421, 2
  %vm442 = vcmp.lt.s32.totalorder %v421, 3
  %vm443 = vcmp.lt.s32.totalorder %v421, 4
  %v444 = vsel %vm440, %v424, %v427
  %v445 = vsel %vm443, %v433, 2102212464
  %v446 = vsel %vm442, %v430, %v445
  %v447 = vsel %vm441, %v444, %v446
  %v448 = vsel %vm440, %v427, %v430
  %v449 = vsel %vm443, %v436, 920167782
  %v450 = vsel %vm442, %v433, %v449
  %v451 = vsel %vm441, %v448, %v450
  %v452 = vsel %vm440, %v430, %v433
  %v453 = vsel %vm443, %v439, 1326507024
  %v454 = vsel %vm442, %v436, %v453
  %v455 = vsel %vm441, %v452, %v454
  %v456 = vshll.u32 %v416, 8
  %v457 = vmul.u32.u64.compose %v456, %v455
  %v458 = vextract.low.u32 %v457
  %v459 = vextract.high.u32 %v457
  %v460 = vmul.u32.u64.compose %v456, %v451
  %v461 = vextract.low.u32 %v460
  %v462 = vextract.high.u32 %v460
  %v463 = vmul.u32 %v456, %v447
  %v464 = vadd.s32 %v459, %v461
  %vm465 = vc.u32 %v459, %v461
  %v466 = vadd.s32 %v462, 1
  %v467 = vsel %vm465, %v466, %v462
  %v468 = vadd.s32 %v463, %v467
  %v469 = vadd.s32 %v468, 536870912
  %v470 = vshrl.u32 %v469, 30
  %v471 = vshll.u32 %v470, 30
  %v472 = vsub.s32 %v468, %v471
  %vm473 = vcmp.lt.s32.totalorder %v472, 0
  %v474 = vsub.s32 0, %v472
  %v475 = vsel %vm473, %v474, %v472
  %v476 = vclz %v475
  %v477 = vsub.s32 %v476, 2
  %vm478 = vcmp.gt.s32.totalorder 0, %v477
  %v479 = vsel %vm478, 0, %v477
  %v480 = vsub.s32 32, %v479
  %v481 = vshll.u32 %v472, %v479
  %v482 = vshrl.u32 %v464, %v480
  %v483 = vor.u32 %v481, %v482
  %v484 = vsub.s32 4294967266, %v479
  %v485 = vadd.s32 %v484, 127
  %v486 = vshll.u32 %v485, 23
  %v487 = vor.u32 4788187, %v486
  %v488 = vand.u32 2147483647, %v487
  %v490 = vcvt.s32.f32 %v483
  %v491 = vmul.f32 %v490, %v488
  %v492 = vxor.u32 %v491, 2147483648
  %v493 = vsel %vm410, %v492, %v491
  %v494 = vsub.s32 4, %v470
  %v495 = vsel %vm410, %v494, %v470
  %v496 = vsel %vm409, %v95, %v493
  %v497 = vsel %vm409, 0, %v495
  %v498 = vcosq.f32.pop %v496
  %v499 = vsinq.f32.pop %v496
  %vm500 = vweird.f32 %v95
  %v501 = vand.u32 %v497, 3
  %vm502 = vcmp.lt.s32.totalorder %v501, 2
  %vm503 = vcmp.eq.s32.totalorder %v501, 0
  %v504 = vxor.u32 %v499, 2147483648
  %v505 = vsel %vm503, %v498, %v504
  %vm506 = vcmp.eq.s32.totalorder %v501, 2
  %v507 = vxor.u32 %v498, 2147483648
  %v508 = vsel %vm506, %v507, %v499
  %v509 = vsel %vm502, %v505, %v508
  %v510 = vsel %vm500, nan, %v509
  %v511 = vpack.c.bf16 %v510, %v407
  %v512 = vld [vmem:[%s0] sm:$0xf]
  %v513 = vld [vmem:[%s0 + $0x4] sm:$0xf]
  %v514 = vld [vmem:[%s3] sm:$0xf]
  %v515 = vld [vmem:[%s3 + $0x4] sm:$0xf]
  %v516 = vld [vmem:[%s3 + $0x8] sm:$0xf]
  %v517 = vld [vmem:[%s3 + $0xc] sm:$0x3]
  %v518 = vld [vmem:[%s4] sm:$0xf]
  %v519 = vld [vmem:[%s4 + $0x4] sm:$0xf]
  %v520 = vld [vmem:[%s4 + $0x8] sm:$0xf]
  %v521 = vld [vmem:[%s4 + $0xc] sm:$0xf]
  %v526 = vunpack.c.l.b16 %v518
  %v527 = vunpack.c.l.b16 %v519
  %v528 = vunpack.c.l.b16 %v520
  %v529 = vunpack.c.l.b16 %v521
  %v530 = vpack.c.b16 %v527, %v526
  %v531 = vpack.c.b16 %v529, %v528
  %vm534 = vcmask 261120
  %v536 = vsel %vm534, %v304, 0
  %538 = vmatprep.subr.bf16.mxu0 0
  %539 = vmatpush1.bf16.msra.mxu0 %v530
  %540 = vmatprep.subr.bf16.mxu0 0
  %541 = vmatpush1.bf16.msra.mxu0 %v531
  %542 = vmatprep.subr.bf16.mxu0 0
  %543 = vmatpush1.bf16.msra.mxu0 0
  %544 = vmatprep.subr.bf16.mxu0 0
  %545 = vmatpush1.bf16.msra.mxu0 0
  %546 = vmatprep.subr.bf16.mxu0 0
  %547 = vmatpush1.bf16.msra.mxu0 0
  %548 = vmatprep.subr.bf16.mxu0 0
  %549 = vmatpush1.bf16.msra.mxu0 0
  %550 = vmatprep.subr.bf16.mxu0 0
  %551 = vmatpush1.bf16.msra.mxu0 0
  %552 = vmatprep.subr.bf16.mxu0 0
  %553 = vmatpush1.bf16.msra.mxu0 0
  %554 = vmatprep.subr.bf16.mxu0 0
  %555 = vmatpush1.bf16.msra.mxu0 0
  %556 = vmatprep.subr.bf16.mxu0 0
  %557 = vmatpush1.bf16.msra.mxu0 0
  %558 = vmatprep.subr.bf16.mxu0 0
  %559 = vmatpush1.bf16.msra.mxu0 0
  %560 = vmatprep.subr.bf16.mxu0 0
  %561 = vmatpush1.bf16.msra.mxu0 0
  %562 = vmatprep.subr.bf16.mxu0 0
  %563 = vmatpush1.bf16.msra.mxu0 0
  %564 = vmatprep.subr.bf16.mxu0 0
  %565 = vmatpush1.bf16.msra.mxu0 0
  %566 = vmatprep.subr.bf16.mxu0 0
  %567 = vmatpush1.bf16.msra.mxu0 0
  %568 = vmatprep.subr.bf16.mxu0 0
  %569 = vmatpush1.bf16.msra.mxu0 0
  %570 = vmatprep.mubr.bf16.mxu0 0
  %571 = vmatmul.mubr.bf16.gmra.mrb[0].mxu0 %v536
  %v572 = vpop.f32.mrb[0].mxu0
  %v573 = vadd.f32 0.0, %v572
  %v574 = vpop.f32.mrb[0].mxu0
  %v575 = vpop.f32.mrb[0].mxu0
  %v576 = vadd.f32 0.0, %v575
  %v577 = vpop.f32.mrb[0].mxu0
  %578 = vdwg.mxu0
  %v581 = vunpack.c.l.b16 %v512
  %v582 = vunpack.c.l.b16 %v513
  %v583 = vpack.c.b16 %v582, %v581
  %v588 = vunpack.c.l.b16 %v514
  %v589 = vunpack.c.l.b16 %v515
  %v590 = vunpack.c.l.b16 %v516
  %v591 = vunpack.c.l.b16 %v517
  %v592 = vpack.c.b16 %v589, %v588
  %v593 = vpack.c.b16 %v591, %v590
  %vm595 = vcmask 220160
  %v597 = vsel %vm595, %v583, 0
  %vm599 = vcmask 1044480
  %vm600 = vcmask 1045504
  %v601 = vsel %vm599, 4294967295, 65535
  %v602 = vsel %vm600, %v601, 0
  %v604 = vand.u32 %v593, %v602
  %606 = vmatprep.subr.bf16.mxu0 0
  %607 = vmatpush1.bf16.msra.mxu0 %v592
  %608 = vmatprep.subr.bf16.mxu0 0
  %609 = vmatpush1.bf16.msra.mxu0 %v604
  %610 = vmatprep.subr.bf16.mxu0 0
  %611 = vmatpush1.bf16.msra.mxu0 0
  %612 = vmatprep.subr.bf16.mxu0 0
  %613 = vmatpush1.bf16.msra.mxu0 0
  %614 = vmatprep.subr.bf16.mxu0 0
  %615 = vmatpush1.bf16.msra.mxu0 0
  %616 = vmatprep.subr.bf16.mxu0 0
  %617 = vmatpush1.bf16.msra.mxu0 0
  %618 = vmatprep.subr.bf16.mxu0 0
  %619 = vmatpush1.bf16.msra.mxu0 0
  %620 = vmatprep.subr.bf16.mxu0 0
  %621 = vmatpush1.bf16.msra.mxu0 0
  %622 = vmatprep.subr.bf16.mxu0 0
  %623 = vmatpush1.bf16.msra.mxu0 0
  %624 = vmatprep.subr.bf16.mxu0 0
  %625 = vmatpush1.bf16.msra.mxu0 0
  %626 = vmatprep.subr.bf16.mxu0 0
  %627 = vmatpush1.bf16.msra.mxu0 0
  %628 = vmatprep.subr.bf16.mxu0 0
  %629 = vmatpush1.bf16.msra.mxu0 0
  %630 = vmatprep.subr.bf16.mxu0 0
  %631 = vmatpush1.bf16.msra.mxu0 0
  %632 = vmatprep.subr.bf16.mxu0 0
  %633 = vmatpush1.bf16.msra.mxu0 0
  %634 = vmatprep.subr.bf16.mxu0 0
  %635 = vmatpush1.bf16.msra.mxu0 0
  %636 = vmatprep.subr.bf16.mxu0 0
  %637 = vmatpush1.bf16.msra.mxu0 0
  %638 = vmatprep.mubr.bf16.mxu0 0
  %639 = vmatmul.mubr.bf16.gmra.mrb[0].mxu0 %v597
  %v640 = vpop.f32.mrb[0].mxu0
  %v641 = vadd.f32 %v573, %v640
  %v642 = vpop.f32.mrb[0].mxu0
  %v643 = vpop.f32.mrb[0].mxu0
  %v644 = vadd.f32 %v576, %v643
  %v645 = vpop.f32.mrb[0].mxu0
  %646 = vdwg.mxu0
  %v647 = vld [vmem:[%s5] sm:$0xf]
  %v648 = vld [vmem:[%s5 + $0x4] sm:$0xf]
  %v649 = vld [vmem:[%s5 + $0x8] sm:$0xf]
  %v650 = vld [vmem:[%s5 + $0xc] sm:$0xf]
  %v655 = vunpack.c.l.b16 %v647
  %v656 = vunpack.c.l.b16 %v648
  %v657 = vunpack.c.l.b16 %v649
  %v658 = vunpack.c.l.b16 %v650
  %v659 = vpack.c.b16 %v656, %v655
  %v660 = vpack.c.b16 %v658, %v657
  %v664 = vsel %vm534, %v511, 0
  %666 = vmatprep.subr.bf16.mxu0 0
  %667 = vmatpush1.bf16.msra.mxu0 %v659
  %668 = vmatprep.subr.bf16.mxu0 0
  %669 = vmatpush1.bf16.msra.mxu0 %v660
  %670 = vmatprep.subr.bf16.mxu0 0
  %671 = vmatpush1.bf16.msra.mxu0 0
  %672 = vmatprep.subr.bf16.mxu0 0
  %673 = vmatpush1.bf16.msra.mxu0 0
  %674 = vmatprep.subr.bf16.mxu0 0
  %675 = vmatpush1.bf16.msra.mxu0 0
  %676 = vmatprep.subr.bf16.mxu0 0
  %677 = vmatpush1.bf16.msra.mxu0 0
  %678 = vmatprep.subr.bf16.mxu0 0
  %679 = vmatpush1.bf16.msra.mxu0 0
  %680 = vmatprep.subr.bf16.mxu0 0
  %681 = vmatpush1.bf16.msra.mxu0 0
  %682 = vmatprep.subr.bf16.mxu0 0
  %683 = vmatpush1.bf16.msra.mxu0 0
  %684 = vmatprep.subr.bf16.mxu0 0
  %685 = vmatpush1.bf16.msra.mxu0 0
  %686 = vmatprep.subr.bf16.mxu0 0
  %687 = vmatpush1.bf16.msra.mxu0 0
  %688 = vmatprep.subr.bf16.mxu0 0
  %689 = vmatpush1.bf16.msra.mxu0 0
  %690 = vmatprep.subr.bf16.mxu0 0
  %691 = vmatpush1.bf16.msra.mxu0 0
  %692 = vmatprep.subr.bf16.mxu0 0
  %693 = vmatpush1.bf16.msra.mxu0 0
  %694 = vmatprep.subr.bf16.mxu0 0
  %695 = vmatpush1.bf16.msra.mxu0 0
  %696 = vmatprep.subr.bf16.mxu0 0
  %697 = vmatpush1.bf16.msra.mxu0 0
  %698 = vmatprep.mubr.bf16.mxu0 0
  %699 = vmatmul.mubr.bf16.gmra.mrb[0].mxu0 %v664
  %v700 = vpop.f32.mrb[0].mxu0
  %v701 = vadd.f32 0.0, %v700
  %v702 = vpop.f32.mrb[0].mxu0
  %v703 = vpop.f32.mrb[0].mxu0
  %v704 = vadd.f32 0.0, %v703
  %v705 = vpop.f32.mrb[0].mxu0
  %706 = vdwg.mxu0
  %v707 = vadd.f32 %v641, %v701
  %v708 = vadd.f32 %v644, %v704
  %v709 = vld [vmem:[%s6] sm:$0x1]
  %v711 = vlaneseq
  %v712 = vshrl.u32 %v711, 7
  %v713 = vsub.s32 0, %v712
  %v714 = vrot.slane %v709, %v713
  %v716 = vadd.f32 %v707, %v714
  %v717 = vadd.f32 %v708, %v714
  %v718 = vmax.f32 %v716, 0.0
  %v719 = vmax.f32 %v717, 0.0
  %v720 = vpack.c.bf16 %v719, %v718
  %v721 = vld [vmem:[%s7] sm:$0xf]
  %v722 = vld [vmem:[%s7 + $0x4] sm:$0xf]
  %v723 = vld [vmem:[%s7 + $0x8] sm:$0xf]
  %v724 = vld [vmem:[%s7 + $0xc] sm:$0xf]
  %v725 = vld [vmem:[%s7 + $0x10] sm:$0xf]
  %v726 = vld [vmem:[%s7 + $0x14] sm:$0xf]
  %v727 = vld [vmem:[%s7 + $0x18] sm:$0xf]
  %v728 = vld [vmem:[%s7 + $0x1c] sm:$0xf]
  %v729 = vld [vmem:[%s7 + $0x20] sm:$0xf]
  %v730 = vld [vmem:[%s7 + $0x24] sm:$0xf]
  %v731 = vld [vmem:[%s7 + $0x28] sm:$0xf]
  %v732 = vld [vmem:[%s7 + $0x2c] sm:$0xf]
  %v733 = vld [vmem:[%s7 + $0x30] sm:$0xf]
  %v734 = vld [vmem:[%s7 + $0x34] sm:$0xf]
  %v735 = vld [vmem:[%s7 + $0x38] sm:$0xf]
  %v736 = vld [vmem:[%s7 + $0x3c] sm:$0xf]
  %v737 = vld [vmem:[%s8] sm:$0x1]
  %v739 = vlaneseq
  %v740 = vshrl.u32 %v739, 7
  %v741 = vsub.s32 0, %v740
  %v742 = vrot.slane %v737, %v741
  %v760 = vunpack.c.l.b16 %v721
  %v761 = vunpack.c.l.b16 %v722
  %v762 = vunpack.c.l.b16 %v723
  %v763 = vunpack.c.l.b16 %v724
  %v764 = vunpack.c.l.b16 %v725
  %v765 = vunpack.c.l.b16 %v726
  %v766 = vunpack.c.l.b16 %v727
  %v767 = vunpack.c.l.b16 %v728
  %v768 = vunpack.c.l.b16 %v729
  %v769 = vunpack.c.l.b16 %v730
  %v770 = vunpack.c.l.b16 %v731
  %v771 = vunpack.c.l.b16 %v732
  %v772 = vunpack.c.l.b16 %v733
  %v773 = vunpack.c.l.b16 %v734
  %v774 = vunpack.c.l.b16 %v735
  %v775 = vunpack.c.l.b16 %v736
  %v776 = vpack.c.b16 %v761, %v760
  %v777 = vpack.c.b16 %v763, %v762
  %v778 = vpack.c.b16 %v765, %v764
  %v779 = vpack.c.b16 %v767, %v766
  %v780 = vpack.c.b16 %v769, %v768
  %v781 = vpack.c.b16 %v771, %v770
  %v782 = vpack.c.b16 %v773, %v772
  %v783 = vpack.c.b16 %v775, %v774
  %792 = vmatprep.subr.bf16.mxu0 0
  %793 = vmatpush1.bf16.msra.mxu0 %v776
  %794 = vmatprep.subr.bf16.mxu0 0
  %795 = vmatpush1.bf16.msra.mxu0 %v777
  %796 = vmatprep.subr.bf16.mxu0 0
  %797 = vmatpush1.bf16.msra.mxu0 %v778
  %798 = vmatprep.subr.bf16.mxu0 0
  %799 = vmatpush1.bf16.msra.mxu0 %v779
  %800 = vmatprep.subr.bf16.mxu0 0
  %801 = vmatpush1.bf16.msra.mxu0 %v780
  %802 = vmatprep.subr.bf16.mxu0 0
  %803 = vmatpush1.bf16.msra.mxu0 %v781
  %804 = vmatprep.subr.bf16.mxu0 0
  %805 = vmatpush1.bf16.msra.mxu0 %v782
  %806 = vmatprep.subr.bf16.mxu0 0
  %807 = vmatpush1.bf16.msra.mxu0 %v783
  %808 = vmatprep.subr.bf16.mxu0 0
  %809 = vmatpush1.bf16.msra.mxu0 0
  %810 = vmatprep.subr.bf16.mxu0 0
  %811 = vmatpush1.bf16.msra.mxu0 0
  %812 = vmatprep.subr.bf16.mxu0 0
  %813 = vmatpush1.bf16.msra.mxu0 0
  %814 = vmatprep.subr.bf16.mxu0 0
  %815 = vmatpush1.bf16.msra.mxu0 0
  %816 = vmatprep.subr.bf16.mxu0 0
  %817 = vmatpush1.bf16.msra.mxu0 0
  %818 = vmatprep.subr.bf16.mxu0 0
  %819 = vmatpush1.bf16.msra.mxu0 0
  %820 = vmatprep.subr.bf16.mxu0 0
  %821 = vmatpush1.bf16.msra.mxu0 0
  %822 = vmatprep.subr.bf16.mxu0 0
  %823 = vmatpush1.bf16.msra.mxu0 0
  %824 = vmatprep.mubr.bf16.mxu0 0
  %825 = vmatmul.mubr.bf16.gmra.mrb[0].mxu0 %v720
  %v826 = vpop.f32.mrb[0].mxu0
  %v827 = vadd.f32 %v742, %v826
  %v828 = vpop.f32.mrb[0].mxu0
  %v829 = vpop.f32.mrb[0].mxu0
  %v830 = vadd.f32 %v742, %v829
  %v831 = vpop.f32.mrb[0].mxu0
  %832 = vdwg.mxu0
  %v833 = vmax.f32 %v827, 0.0
  %v834 = vmax.f32 %v830, 0.0
  %v835 = vpack.c.bf16 %v834, %v833
  %v836 = vld [vmem:[%s9] sm:$0xf]
  %v837 = vld [vmem:[%s9 + $0x4] sm:$0xf]
  %v838 = vld [vmem:[%s9 + $0x8] sm:$0xf]
  %v839 = vld [vmem:[%s9 + $0xc] sm:$0xf]
  %v840 = vld [vmem:[%s9 + $0x10] sm:$0xf]
  %v841 = vld [vmem:[%s9 + $0x14] sm:$0xf]
  %v842 = vld [vmem:[%s9 + $0x18] sm:$0xf]
  %v843 = vld [vmem:[%s9 + $0x1c] sm:$0xf]
  %v844 = vld [vmem:[%s9 + $0x20] sm:$0xf]
  %v845 = vld [vmem:[%s9 + $0x24] sm:$0xf]
  %v846 = vld [vmem:[%s9 + $0x28] sm:$0xf]
  %v847 = vld [vmem:[%s9 + $0x2c] sm:$0xf]
  %v848 = vld [vmem:[%s9 + $0x30] sm:$0xf]
  %v849 = vld [vmem:[%s9 + $0x34] sm:$0xf]
  %v850 = vld [vmem:[%s9 + $0x38] sm:$0xf]
  %v851 = vld [vmem:[%s9 + $0x3c] sm:$0xf]
  %v852 = vld [vmem:[%s10] sm:$0x1]
  %v854 = vlaneseq
  %v855 = vshrl.u32 %v854, 7
  %v856 = vsub.s32 0, %v855
  %v857 = vrot.slane %v852, %v856
  %v875 = vunpack.c.l.b16 %v836
  %v876 = vunpack.c.l.b16 %v837
  %v877 = vunpack.c.l.b16 %v838
  %v878 = vunpack.c.l.b16 %v839
  %v879 = vunpack.c.l.b16 %v840
  %v880 = vunpack.c.l.b16 %v841
  %v881 = vunpack.c.l.b16 %v842
  %v882 = vunpack.c.l.b16 %v843
  %v883 = vunpack.c.l.b16 %v844
  %v884 = vunpack.c.l.b16 %v845
  %v885 = vunpack.c.l.b16 %v846
  %v886 = vunpack.c.l.b16 %v847
  %v887 = vunpack.c.l.b16 %v848
  %v888 = vunpack.c.l.b16 %v849
  %v889 = vunpack.c.l.b16 %v850
  %v890 = vunpack.c.l.b16 %v851
  %v891 = vpack.c.b16 %v876, %v875
  %v892 = vpack.c.b16 %v878, %v877
  %v893 = vpack.c.b16 %v880, %v879
  %v894 = vpack.c.b16 %v882, %v881
  %v895 = vpack.c.b16 %v884, %v883
  %v896 = vpack.c.b16 %v886, %v885
  %v897 = vpack.c.b16 %v888, %v887
  %v898 = vpack.c.b16 %v890, %v889
  %907 = vmatprep.subr.bf16.mxu0 0
  %908 = vmatpush1.bf16.msra.mxu0 %v891
  %909 = vmatprep.subr.bf16.mxu0 0
  %910 = vmatpush1.bf16.msra.mxu0 %v892
  %911 = vmatprep.subr.bf16.mxu0 0
  %912 = vmatpush1.bf16.msra.mxu0 %v893
  %913 = vmatprep.subr.bf16.mxu0 0
  %914 = vmatpush1.bf16.msra.mxu0 %v894
  %915 = vmatprep.subr.bf16.mxu0 0
  %916 = vmatpush1.bf16.msra.mxu0 %v895
  %917 = vmatprep.subr.bf16.mxu0 0
  %918 = vmatpush1.bf16.msra.mxu0 %v896
  %919 = vmatprep.subr.bf16.mxu0 0
  %920 = vmatpush1.bf16.msra.mxu0 %v897
  %921 = vmatprep.subr.bf16.mxu0 0
  %922 = vmatpush1.bf16.msra.mxu0 %v898
  %923 = vmatprep.subr.bf16.mxu0 0
  %924 = vmatpush1.bf16.msra.mxu0 0
  %925 = vmatprep.subr.bf16.mxu0 0
  %926 = vmatpush1.bf16.msra.mxu0 0
  %927 = vmatprep.subr.bf16.mxu0 0
  %928 = vmatpush1.bf16.msra.mxu0 0
  %929 = vmatprep.subr.bf16.mxu0 0
  %930 = vmatpush1.bf16.msra.mxu0 0
  %931 = vmatprep.subr.bf16.mxu0 0
  %932 = vmatpush1.bf16.msra.mxu0 0
  %933 = vmatprep.subr.bf16.mxu0 0
  %934 = vmatpush1.bf16.msra.mxu0 0
  %935 = vmatprep.subr.bf16.mxu0 0
  %936 = vmatpush1.bf16.msra.mxu0 0
  %937 = vmatprep.subr.bf16.mxu0 0
  %938 = vmatpush1.bf16.msra.mxu0 0
  %939 = vmatprep.mubr.bf16.mxu0 0
  %940 = vmatmul.mubr.bf16.gmra.mrb[0].mxu0 %v835
  %v941 = vpop.f32.mrb[0].mxu0
  %v942 = vadd.f32 %v857, %v941
  %v943 = vpop.f32.mrb[0].mxu0
  %v944 = vpop.f32.mrb[0].mxu0
  %v945 = vadd.f32 %v857, %v944
  %v946 = vpop.f32.mrb[0].mxu0
  %947 = vdwg.mxu0
  %v948 = vmax.f32 %v942, 0.0
  %v949 = vmax.f32 %v945, 0.0
  %v950 = vld [vmem:[%s11] sm:$0xf]
  %v951 = vpack.c.bf16 %v949, %v948
  %v952 = vld [vmem:[%s12] sm:$0xff]
  %954 = vset.pattern.permute.xlu0 0
  %955 = vperm.xlu0 %954, %v952
  %v956 = vpop.permute.xlu0 %955
  %958 = vmatprep.subr.bf16.mxu0 0
  %959 = vmatpush1.bf16.xpose.msra.mxu0 %v951
  %960 = vmatprep.subr.bf16.mxu0 0
  %961 = vmatpush1.bf16.xpose.msra.mxu0 0
  %962 = vmatprep.subr.bf16.mxu0 0
  %963 = vmatpush1.bf16.xpose.msra.mxu0 0
  %964 = vmatprep.subr.bf16.mxu0 0
  %965 = vmatpush1.bf16.xpose.msra.mxu0 0
  %966 = vmatprep.subr.bf16.mxu0 0
  %967 = vmatpush1.bf16.xpose.msra.mxu0 0
  %968 = vmatprep.subr.bf16.mxu0 0
  %969 = vmatpush1.bf16.xpose.msra.mxu0 0
  %970 = vmatprep.subr.bf16.mxu0 0
  %971 = vmatpush1.bf16.xpose.msra.mxu0 0
  %972 = vmatprep.subr.bf16.mxu0 0
  %973 = vmatpush1.bf16.xpose.msra.mxu0 0
  %974 = vmatprep.subr.bf16.mxu0 0
  %975 = vmatpush1.bf16.xpose.msra.mxu0 0
  %976 = vmatprep.subr.bf16.mxu0 0
  %977 = vmatpush1.bf16.xpose.msra.mxu0 0
  %978 = vmatprep.subr.bf16.mxu0 0
  %979 = vmatpush1.bf16.xpose.msra.mxu0 0
  %980 = vmatprep.subr.bf16.mxu0 0
  %981 = vmatpush1.bf16.xpose.msra.mxu0 0
  %982 = vmatprep.subr.bf16.mxu0 0
  %983 = vmatpush1.bf16.xpose.msra.mxu0 0
  %984 = vmatprep.subr.bf16.mxu0 0
  %985 = vmatpush1.bf16.xpose.msra.mxu0 0
  %986 = vmatprep.subr.bf16.mxu0 0
  %987 = vmatpush1.bf16.xpose.msra.mxu0 0
  %988 = vmatprep.subr.bf16.mxu0 0
  %989 = vmatpush1.bf16.xpose.msra.mxu0 0
  %990 = vmatprep.mubr.bf16.mxu0 0
  %991 = vmatmul.mubr.bf16.gmra.mrb[0].mxu0 %v950
  %v992 = vpop.f32.mrb[0].mxu0
  %v993 = vadd.f32 %v956, %v992
  %v994 = vpop.f32.mrb[0].mxu0
  %v995 = vpop.f32.mrb[0].mxu0
  %v996 = vpop.f32.mrb[0].mxu0
  %997 = vdwg.mxu0
  %vm998 = vcmask 130048
  %999 = vst.msk [vmem:[%s13] sm:$0xff] %vm998, %v993
  // Predicated region
  $region54: #{posterior_forward.1} parent=0 // pred_check
    _
  $region55: #{posterior_forward.1} parent=0 // pred_check_branch
    %1001 = sbr.rel (0) target = $region57
  $region56: #{posterior_forward.1} parent=0 // pred_region
    _
  $region57: #{posterior_forward.1} parent=0 // pred_fallthru
    _
  // Predicated region
  $region58: #{posterior_forward.1} parent=0 // pred_check
    _
  $region59: #{posterior_forward.1} parent=0 // pred_check_branch
    %1003 = sbr.rel (0) target = $region61
  $region60: #{posterior_forward.1} parent=0 // pred_region
    _
  $region61: #{posterior_forward.1} parent=0 // pred_fallthru
    _

</llo_original>
